<compile_context>
chip_gen: v6e
topology: v6e:2x2x1
jax: 0.10.0
libtpu: 0.0.40
codegen_flags: <defaults>
</compile_context>

<pallas_src>
import jax
import jax.numpy as jnp
from jax.experimental import pallas as pl
from jax.experimental.pallas import tpu as pltpu


def controller_kernel(state_ref, w1_ref, w2_ref, bias_ref, out_ref):
    # state_ref : (TB, 3N)  columns grouped [error | error_sum | last_error]
    # w1_ref    : (N, H),  w2_ref : (H, 3N)
    # bias_ref  : (1, H + 3N)  columns grouped [b1 | b2]
    # out_ref   : (TB, 2N) columns grouped [control | error_sum_new]
    n = out_ref.shape[-1] // 2
    h = w1_ref.shape[-1]

    err = state_ref[:, 0 * n:1 * n]                       # (TB, N)
    esum = state_ref[:, 1 * n:2 * n]
    lerr = state_ref[:, 2 * n:3 * n]
    b1 = bias_ref[:, :h]                                  # (1, H)
    b2 = bias_ref[:, h:]                                  # (1, 3N)

    # ---- inner model (2-layer MLP) on the MXU ----
    hid = jnp.dot(err, w1_ref[...], preferred_element_type=jnp.float32) + b1
    hid = jnp.maximum(hid, 0.0)                           # (TB, H)
    pid = jnp.dot(hid, w2_ref[...], preferred_element_type=jnp.float32) + b2
    # pid: (TB, 3N), grouped [P | I | D] == PyTorch (B, 3, N) flattened

    p_gain = pid[:, 0 * n:1 * n]
    i_gain = pid[:, 1 * n:2 * n]
    d_gain = pid[:, 2 * n:3 * n]

    # ---- PID control law (VPU elementwise) ----
    esum_new = esum + err
    control = p_gain * err + i_gain * esum_new + d_gain * (err - lerr)

    out_ref[:, :n] = control
    out_ref[:, n:] = esum_new


def _pick_batch_tile(batch):
    # Largest tile (multiple of 8, <=256) that evenly divides the batch;
    # fall back to the whole batch as a single block.
    for tb in (256, 128, 64, 32, 16, 8):
        if batch % tb == 0:
            return tb
    return batch


def controller_forward(error, error_sum, last_error, w1, b1, w2, b2):
    """Returns (control, new_error_sum, new_last_error)."""
    B, N = error.shape
    H = w1.shape[-1]

    # Pack activations and biases into lane-dense slabs (fewer, larger DMAs).
    state = jnp.concatenate([error, error_sum, last_error], axis=-1)  # (B, 3N)
    bias = jnp.concatenate([b1, b2], axis=-1)                         # (1, H+3N)

    tb = _pick_batch_tile(B)
    grid = (B // tb,)

    out = pl.pallas_call(
        controller_kernel,
        out_shape=jax.ShapeDtypeStruct((B, 2 * N), jnp.float32),
        grid=grid,
        in_specs=[
            pl.BlockSpec((tb, 3 * N), lambda i: (i, 0)),      # state slab
            pl.BlockSpec((N, H), lambda i: (0, 0)),           # w1 (resident)
            pl.BlockSpec((H, 3 * N), lambda i: (0, 0)),       # w2 (resident)
            pl.BlockSpec((1, H + 3 * N), lambda i: (0, 0)),   # bias slab
        ],
        out_specs=pl.BlockSpec((tb, 2 * N), lambda i: (i, 0)),
        compiler_params=pltpu.CompilerParams(
            dimension_semantics=("parallel",)),
    )(state, w1, w2, bias)

    control = out[:, :N]
    esum_new = out[:, N:]
    # new last_error is just the input error (state update done in wrapper)
    return control, esum_new, error


def reference_forward(error, error_sum, last_error, w1, b1, w2, b2):
    h = jnp.maximum(error @ w1 + b1, 0.0)
    pid = (h @ w2 + b2).reshape(error.shape[0], 3, error.shape[-1])
    esum_new = error_sum + error
    control = (pid[:, 0, :] * error
               + pid[:, 1, :] * esum_new
               + pid[:, 2, :] * (error - last_error))
    return control, esum_new


if __name__ == "__main__":
    B, N, H = 8, 128, 128   # batch, spatial points, MLP hidden width

    key = jax.random.PRNGKey(0)
    k_err, k_le, k_es, k_w1, k_b1, k_w2, k_b2 = jax.random.split(key, 7)

    error = jax.random.normal(k_err, (B, N), dtype=jnp.float32)
    last_error = jax.random.normal(k_le, (B, N), dtype=jnp.float32)
    error_sum = jax.random.normal(k_es, (B, N), dtype=jnp.float32)

    # deterministic MLP parameters (fan-in scaled)
    w1 = jax.random.normal(k_w1, (N, H), dtype=jnp.float32) / jnp.sqrt(N)
    b1 = jax.random.normal(k_b1, (1, H), dtype=jnp.float32) * 0.01
    w2 = jax.random.normal(k_w2, (H, 3 * N), dtype=jnp.float32) / jnp.sqrt(H)
    b2 = jax.random.normal(k_b2, (1, 3 * N), dtype=jnp.float32) * 0.01

    control, esum_new, new_last_error = controller_forward(
        error, error_sum, last_error, w1, b1, w2, b2)
    jax.block_until_ready((control, esum_new, new_last_error))

    ref_control, ref_esum = reference_forward(
        error, error_sum, last_error, w1, b1, w2, b2)
    assert jnp.allclose(control, ref_control, atol=1e-4, rtol=1e-4)
    assert jnp.allclose(esum_new, ref_esum, atol=1e-5, rtol=1e-5)
    assert jnp.allclose(new_last_error, error)
    assert control.shape == (B, N)

    print("KERNEL_OK")
</pallas_src>

<mosaic_0001>
module attributes {stable_mosaic.version = 11 : i64} {
  func.func @controller_kernel(%arg0: i32, %arg1: memref<8x384xf32, #tpu.memory_space<vmem>>, %arg2: memref<128x128xf32, #tpu.memory_space<vmem>>, %arg3: memref<128x384xf32, #tpu.memory_space<vmem>>, %arg4: memref<1x512xf32, #tpu.memory_space<vmem>>, %arg5: memref<8x256xf32, #tpu.memory_space<vmem>>) attributes {dimension_semantics = [#tpu.dimension_semantics<parallel>], iteration_bounds = array<i64: 1>, scalar_prefetch = 0 : i64, scratch_operands = 0 : i64, tpu.core_type = #tpu.core_type<tc>, window_params = [{transform_indices = @transform_0, window_bounds = array<i64: 8, 384>}, {pipeline_mode = #tpu.pipeline_mode<synchronous>, transform_indices = @transform_1, window_bounds = array<i64: 128, 128>}, {pipeline_mode = #tpu.pipeline_mode<synchronous>, transform_indices = @transform_2, window_bounds = array<i64: 128, 384>}, {pipeline_mode = #tpu.pipeline_mode<synchronous>, transform_indices = @transform_3, window_bounds = array<i64: 1, 512>}, {transform_indices = @transform_4, window_bounds = array<i64: 8, 256>}]} {
    %c0 = arith.constant 0 : index
    %c0_0 = arith.constant 0 : index
    %0 = vector.load %arg1[%c0, %c0_0] : memref<8x384xf32, #tpu.memory_space<vmem>>, vector<8x128xf32>
    %c0_1 = arith.constant 0 : index
    %c128 = arith.constant 128 : index
    %1 = vector.load %arg1[%c0_1, %c128] : memref<8x384xf32, #tpu.memory_space<vmem>>, vector<8x128xf32>
    %c0_2 = arith.constant 0 : index
    %c256 = arith.constant 256 : index
    %2 = vector.load %arg1[%c0_2, %c256] : memref<8x384xf32, #tpu.memory_space<vmem>>, vector<8x128xf32>
    %c0_3 = arith.constant 0 : index
    %c0_4 = arith.constant 0 : index
    %3 = vector.load %arg4[%c0_3, %c0_4] : memref<1x512xf32, #tpu.memory_space<vmem>>, vector<1x128xf32>
    %c0_5 = arith.constant 0 : index
    %c128_6 = arith.constant 128 : index
    %4 = vector.load %arg4[%c0_5, %c128_6] : memref<1x512xf32, #tpu.memory_space<vmem>>, vector<1x384xf32>
    %c0_7 = arith.constant 0 : index
    %c0_8 = arith.constant 0 : index
    %5 = vector.load %arg2[%c0_7, %c0_8] : memref<128x128xf32, #tpu.memory_space<vmem>>, vector<128x128xf32>
    %cst = arith.constant dense<0.000000e+00> : vector<8x128xf32>
    %6 = tpu.matmul %0, %5, %cst {dimension_numbers = #tpu.dot_dimension_numbers<[1], [0], [0], [1], [0, 0, 1, 1], [], []>} : vector<8x128xf32>, vector<128x128xf32>, vector<8x128xf32> -> vector<8x128xf32>
    %7 = vector.broadcast %3 : vector<1x128xf32> to vector<8x128xf32>
    %8 = arith.addf %6, %7 : vector<8x128xf32>
    %cst_9 = arith.constant 0.000000e+00 : f32
    %9 = vector.broadcast %cst_9 : f32 to vector<8x128xf32>
    %10 = arith.maximumf %8, %9 : vector<8x128xf32>
    %c0_10 = arith.constant 0 : index
    %c0_11 = arith.constant 0 : index
    %11 = vector.load %arg3[%c0_10, %c0_11] : memref<128x384xf32, #tpu.memory_space<vmem>>, vector<128x384xf32>
    %cst_12 = arith.constant dense<0.000000e+00> : vector<8x384xf32>
    %12 = tpu.matmul %10, %11, %cst_12 {dimension_numbers = #tpu.dot_dimension_numbers<[1], [0], [0], [1], [0, 0, 1, 1], [], []>} : vector<8x128xf32>, vector<128x384xf32>, vector<8x384xf32> -> vector<8x384xf32>
    %13 = vector.broadcast %4 : vector<1x384xf32> to vector<8x384xf32>
    %14 = arith.addf %12, %13 : vector<8x384xf32>
    %15 = vector.extract_strided_slice %14 {offsets = [0, 0], sizes = [8, 128], strides = [1, 1]} : vector<8x384xf32> to vector<8x128xf32>
    %16 = vector.extract_strided_slice %14 {offsets = [0, 128], sizes = [8, 128], strides = [1, 1]} : vector<8x384xf32> to vector<8x128xf32>
    %17 = vector.extract_strided_slice %14 {offsets = [0, 256], sizes = [8, 128], strides = [1, 1]} : vector<8x384xf32> to vector<8x128xf32>
    %18 = arith.addf %1, %0 : vector<8x128xf32>
    %19 = arith.mulf %15, %0 : vector<8x128xf32>
    %20 = arith.mulf %16, %18 : vector<8x128xf32>
    %21 = arith.addf %19, %20 : vector<8x128xf32>
    %22 = arith.subf %0, %2 : vector<8x128xf32>
    %23 = arith.mulf %17, %22 : vector<8x128xf32>
    %24 = arith.addf %21, %23 : vector<8x128xf32>
    %c0_13 = arith.constant 0 : index
    %c0_14 = arith.constant 0 : index
    %25 = vector.load %arg5[%c0_13, %c0_14] : memref<8x256xf32, #tpu.memory_space<vmem>>, vector<8x128xf32>
    tpu.vector_store %arg5[%c0_13, %c0_14], %24 {strides = array<i32>} : memref<8x256xf32, #tpu.memory_space<vmem>>, vector<8x128xf32>,
    %c0_15 = arith.constant 0 : index
    %c128_16 = arith.constant 128 : index
    %26 = vector.load %arg5[%c0_15, %c128_16] : memref<8x256xf32, #tpu.memory_space<vmem>>, vector<8x128xf32>
    tpu.vector_store %arg5[%c0_15, %c128_16], %18 {strides = array<i32>} : memref<8x256xf32, #tpu.memory_space<vmem>>, vector<8x128xf32>,
    return
  }
  func.func @transform_0(%arg0: i32) -> (i32, i32) {
    %c0_i32 = arith.constant 0 : i32
    %c0_i32_0 = arith.constant 0 : i32
    return %arg0, %c0_i32 : i32, i32
  }
  func.func @transform_1(%arg0: i32) -> (i32, i32) {
    %c0_i32 = arith.constant 0 : i32
    %c0_i32_0 = arith.constant 0 : i32
    %c0_i32_1 = arith.constant 0 : i32
    return %c0_i32, %c0_i32_0 : i32, i32
  }
  func.func @transform_2(%arg0: i32) -> (i32, i32) {
    %c0_i32 = arith.constant 0 : i32
    %c0_i32_0 = arith.constant 0 : i32
    %c0_i32_1 = arith.constant 0 : i32
    return %c0_i32, %c0_i32_0 : i32, i32
  }
  func.func @transform_3(%arg0: i32) -> (i32, i32) {
    %c0_i32 = arith.constant 0 : i32
    %c0_i32_0 = arith.constant 0 : i32
    %c0_i32_1 = arith.constant 0 : i32
    return %c0_i32, %c0_i32_0 : i32, i32
  }
  func.func @transform_4(%arg0: i32) -> (i32, i32) {
    %c0_i32 = arith.constant 0 : i32
    %c0_i32_0 = arith.constant 0 : i32
    return %arg0, %c0_i32 : i32, i32
  }
}

</mosaic_0001>

<llo_original>
// kernel: tpu_custom_call.1
$region0: #{tpu_custom_call.1}
  #allocation0 [shape = 'u32[]', space=smem, size = 0x4, offset = 0x4, fixed_abs, tag = 'smem constant byte address 0x4 - core index']
  #allocation1 [shape = 'u32[144,128]{1,0:T(1,128)}', space=vmem, size = 0x12000, scoped, tag = 'internal scratch']
  %s0 = inlined_call_operand.hbm [shape: f32[8,384], index: 0, kind: input, shape index: {}]
  %s1 = inlined_call_operand.hbm [shape: f32[128,128], index: 1, kind: input, shape index: {}]
  %s2 = inlined_call_operand.hbm [shape: f32[128,384], index: 2, kind: input, shape index: {}]
  %s3 = inlined_call_operand.vmem [shape: f32[1,512], index: 3, kind: input, shape index: {}]
  %s4 = inlined_call_operand.hbm [shape: f32[8,256], index: 4, kind: output, shape index: {}]
  %s5 = sld [smem:[#allocation0]]
  $region38: #{tpu_custom_call.1} parent=0
    _
  %s7 = ssub.s32 1, %s5
  %s8 = scalar_select 0, %s7, %s5
  $region1: #{tpu_custom_call.1} parent=0
    #allocation2 [shape = 'u8[12288]{0}', space=vmem, size = 0x3000, scoped, tag = 'input window, operand 0, single buffered']
    #allocation3 [shape = 's32[1]{0}', space=sflag, size = 0x4, scoped, tag = 'scoped memory for tpu_custom_call.1']
    #allocation4 [shape = 's32[1]{0}', space=sflag, size = 0x4, scoped, tag = 'scoped memory for tpu_custom_call.1']
    #allocation5 [shape = 'u8[65536]{0}', space=vmem, size = 0x10000, scoped, tag = 'input window, operand 1, single buffered']
    #allocation6 [shape = 's32[1]{0}', space=sflag, size = 0x4, scoped, tag = 'scoped memory for tpu_custom_call.1']
    #allocation7 [shape = 'u8[196608]{0}', space=vmem, size = 0x30000, scoped, tag = 'input window, operand 2, single buffered']
    #allocation8 [shape = 'u8[8192]{0}', space=vmem, size = 0x2000, scoped, tag = 'output window, operand 0, single buffered']
    %9 = vsyncpa [#allocation3], 0
    %10 = vsyncpa [#allocation6], 0
    %11 = vsyncpa [#allocation4], 0
    // Predicated region
    $region2: #{tpu_custom_call.1} parent=1 // pred_check
      _
    $region3: #{tpu_custom_call.1} parent=1 // pred_check_branch
      %13 = sbr.rel (0) target = $region5
    $region4: #{tpu_custom_call.1} parent=1 // pred_region
      %s15 = ssub.s32 384, 384
      %16 = vsyncadd [#allocation3], %s15
      %s18 = sshll.u32 [#allocation2], 4
      %s19 = int_to_ptr.vmem [resolvable:$true] %s18
      %21 = dma.hbm_to_vmem [thread:$0]  %s0, 384, %s19, [#allocation3]
    $region5: #{tpu_custom_call.1} parent=1 // pred_fallthru
      _
    // Predicated region
    $region6: #{tpu_custom_call.1} parent=1 // pred_check
      _
    $region7: #{tpu_custom_call.1} parent=1 // pred_check_branch
      %23 = sbr.rel (0) target = $region9
    $region8: #{tpu_custom_call.1} parent=1 // pred_region
      %s25 = ssub.s32 2048, 2048
      %26 = vsyncadd [#allocation6], %s25
      %s27 = sshll.u32 [#allocation5], 4
      %s28 = int_to_ptr.vmem [resolvable:$true] %s27
      %33 = dma.hbm_to_vmem [thread:$0]  %s1, 2048, %s28, [#allocation6], 128, 128, 8
    $region9: #{tpu_custom_call.1} parent=1 // pred_fallthru
      _
    // Predicated region
    $region10: #{tpu_custom_call.1} parent=1 // pred_check
      _
    $region11: #{tpu_custom_call.1} parent=1 // pred_check_branch
      %35 = sbr.rel (0) target = $region13
    $region12: #{tpu_custom_call.1} parent=1 // pred_region
      %s37 = ssub.s32 6144, 6144
      %38 = vsyncadd [#allocation6], %s37
      %s39 = sshll.u32 [#allocation7], 4
      %s40 = int_to_ptr.vmem [resolvable:$true] %s39
      %45 = dma.hbm_to_vmem [thread:$0]  %s2, 6144, %s40, [#allocation6], 384, 384, 24
    $region13: #{tpu_custom_call.1} parent=1 // pred_fallthru
      _
    // Predicated region
    $region14: #{tpu_custom_call.1} parent=1 // pred_check
      _
    $region15: #{tpu_custom_call.1} parent=1 // pred_check_branch
      %47 = sbr.rel (0) target = $region17
    $region16: #{tpu_custom_call.1} parent=1 // pred_region
      _
    $region17: #{tpu_custom_call.1} parent=1 // pred_fallthru
      _
    // Predicated region
    $region18: #{tpu_custom_call.1} parent=1 // pred_check
      _
    $region19: #{tpu_custom_call.1} parent=1 // pred_check_branch
      %49 = sbr.rel (0) target = $region21
    $region20: #{tpu_custom_call.1} parent=1 // pred_region
      %50 = dma.done [#allocation3], 384
    $region21: #{tpu_custom_call.1} parent=1 // pred_fallthru
      _
    // Predicated region
    $region22: #{tpu_custom_call.1} parent=1 // pred_check
      _
    $region23: #{tpu_custom_call.1} parent=1 // pred_check_branch
      %52 = sbr.rel (0) target = $region25
    $region24: #{tpu_custom_call.1} parent=1 // pred_region
      %53 = dma.done [#allocation6], 2048
    $region25: #{tpu_custom_call.1} parent=1 // pred_fallthru
      _
    // Predicated region
    $region26: #{tpu_custom_call.1} parent=1 // pred_check
      _
    $region27: #{tpu_custom_call.1} parent=1 // pred_check_branch
      %55 = sbr.rel (0) target = $region29
    $region28: #{tpu_custom_call.1} parent=1 // pred_region
      %56 = dma.done [#allocation6], 6144
    $region29: #{tpu_custom_call.1} parent=1 // pred_fallthru
      _
    %v57 = vld [vmem:[#allocation2] sm:$0xff]
    %v58 = vld [vmem:[#allocation2 + $0x8] sm:$0xff]
    %v59 = vld [vmem:[#allocation2 + $0x10] sm:$0xff]
    %v60 = vld [vmem:[%s3] sm:$0x1]
    %v61 = vld [vmem:[%s3 + $0x1] sm:$0x7]
    %v62 = vld [vmem:[#allocation5] sm:$0xff]
    %v63 = vld [vmem:[#allocation5 + $0x8] sm:$0xff]
    %v64 = vld [vmem:[#allocation5 + $0x10] sm:$0xff]
    %v65 = vld [vmem:[#allocation5 + $0x18] sm:$0xff]
    %v66 = vld [vmem:[#allocation5 + $0x20] sm:$0xff]
    %v67 = vld [vmem:[#allocation5 + $0x28] sm:$0xff]
    %v68 = vld [vmem:[#allocation5 + $0x30] sm:$0xff]
    %v69 = vld [vmem:[#allocation5 + $0x38] sm:$0xff]
    %v70 = vld [vmem:[#allocation5 + $0x40] sm:$0xff]
    %v71 = vld [vmem:[#allocation5 + $0x48] sm:$0xff]
    %v72 = vld [vmem:[#allocation5 + $0x50] sm:$0xff]
    %v73 = vld [vmem:[#allocation5 + $0x58] sm:$0xff]
    %v74 = vld [vmem:[#allocation5 + $0x60] sm:$0xff]
    %v75 = vld [vmem:[#allocation5 + $0x68] sm:$0xff]
    %v76 = vld [vmem:[#allocation5 + $0x70] sm:$0xff]
    %v77 = vld [vmem:[#allocation5 + $0x78] sm:$0xff]
    %v79 = vlaneseq
    %v80 = vshrl.u32 %v79, 7
    %v81 = vsub.s32 0, %v80
    %v82 = vrot.slane %v60, %v81
    %84 = vmatprep.subr.mxu0 0.0
    %85 = vmatpush1.msra.mxu0 %v77
    %86 = vmatprep.subr.mxu0 0.0
    %87 = vmatpush1.msra.mxu0 %v76
    %88 = vmatprep.subr.mxu0 0.0
    %89 = vmatpush1.msra.mxu0 %v75
    %90 = vmatprep.subr.mxu0 0.0
    %91 = vmatpush1.msra.mxu0 %v74
    %92 = vmatprep.subr.mxu0 0.0
    %93 = vmatpush1.msra.mxu0 %v73
    %94 = vmatprep.subr.mxu0 0.0
    %95 = vmatpush1.msra.mxu0 %v72
    %96 = vmatprep.subr.mxu0 0.0
    %97 = vmatpush1.msra.mxu0 %v71
    %98 = vmatprep.subr.mxu0 0.0
    %99 = vmatpush1.msra.mxu0 %v70
    %100 = vmatprep.subr.mxu0 0.0
    %101 = vmatpush1.msra.mxu0 %v69
    %102 = vmatprep.subr.mxu0 0.0
    %103 = vmatpush1.msra.mxu0 %v68
    %104 = vmatprep.subr.mxu0 0.0
    %105 = vmatpush1.msra.mxu0 %v67
    %106 = vmatprep.subr.mxu0 0.0
    %107 = vmatpush1.msra.mxu0 %v66
    %108 = vmatprep.subr.mxu0 0.0
    %109 = vmatpush1.msra.mxu0 %v65
    %110 = vmatprep.subr.mxu0 0.0
    %111 = vmatpush1.msra.mxu0 %v64
    %112 = vmatprep.subr.mxu0 0.0
    %113 = vmatpush1.msra.mxu0 %v63
    %114 = vmatprep.subr.mxu0 0.0
    %115 = vmatpush1.msra.mxu0 %v62
    %116 = vmatprep.subr.mxu0 0.0
    %117 = vmatpush2.msra.mxu0 0.0
    %118 = vmatprep.subr.mxu0 0.0
    %119 = vmatpush2.msra.mxu0 0.0
    %120 = vmatprep.subr.mxu0 0.0
    %121 = vmatpush2.msra.mxu0 0.0
    %122 = vmatprep.subr.mxu0 0.0
    %123 = vmatpush2.msra.mxu0 0.0
    %124 = vmatprep.subr.mxu0 0.0
    %125 = vmatpush2.msra.mxu0 0.0
    %126 = vmatprep.subr.mxu0 0.0
    %127 = vmatpush2.msra.mxu0 0.0
    %128 = vmatprep.subr.mxu0 0.0
    %129 = vmatpush2.msra.mxu0 0.0
    %130 = vmatprep.subr.mxu0 0.0
    %131 = vmatpush2.msra.mxu0 0.0
    %132 = vmatprep.subr.mxu0 0.0
    %133 = vmatpush2.msra.mxu0 0.0
    %134 = vmatprep.subr.mxu0 0.0
    %135 = vmatpush2.msra.mxu0 0.0
    %136 = vmatprep.subr.mxu0 0.0
    %137 = vmatpush2.msra.mxu0 0.0
    %138 = vmatprep.subr.mxu0 0.0
    %139 = vmatpush2.msra.mxu0 0.0
    %140 = vmatprep.subr.mxu0 0.0
    %141 = vmatpush2.msra.mxu0 0.0
    %142 = vmatprep.subr.mxu0 0.0
    %143 = vmatpush2.msra.mxu0 0.0
    %144 = vmatprep.subr.mxu0 0.0
    %145 = vmatpush2.msra.mxu0 0.0
    %146 = vmatprep.subr.mxu0 0.0
    %147 = vmatpush2.msra.mxu0 0.0
    %148 = vmatprep.mubr.f32.mxu0 0.0
    %149 = vmatmul.mubr.f32.gmra.mxu0 %v57
    %v150 = vpop.f32.mrf.mxu0
    %v151 = vadd.f32 %v82, %v150
    %v152 = vpop.f32.mrf.mxu0
    %153 = vdwg.mxu0
    %v154 = vmax.f32 %v151, 0.0
    %v155 = vld [vmem:[#allocation7] sm:$0xff]
    %v156 = vld [vmem:[#allocation7 + $0x8] sm:$0xff]
    %v157 = vld [vmem:[#allocation7 + $0x10] sm:$0xff]
    %v158 = vld [vmem:[#allocation7 + $0x18] sm:$0xff]
    %v159 = vld [vmem:[#allocation7 + $0x20] sm:$0xff]
    %v160 = vld [vmem:[#allocation7 + $0x28] sm:$0xff]
    %v161 = vld [vmem:[#allocation7 + $0x30] sm:$0xff]
    %v162 = vld [vmem:[#allocation7 + $0x38] sm:$0xff]
    %v163 = vld [vmem:[#allocation7 + $0x40] sm:$0xff]
    %v164 = vld [vmem:[#allocation7 + $0x48] sm:$0xff]
    %v165 = vld [vmem:[#allocation7 + $0x50] sm:$0xff]
    %v166 = vld [vmem:[#allocation7 + $0x58] sm:$0xff]
    %v167 = vld [vmem:[#allocation7 + $0x60] sm:$0xff]
    %v168 = vld [vmem:[#allocation7 + $0x68] sm:$0xff]
    %v169 = vld [vmem:[#allocation7 + $0x70] sm:$0xff]
    %v170 = vld [vmem:[#allocation7 + $0x78] sm:$0xff]
    %v171 = vld [vmem:[#allocation7 + $0x80] sm:$0xff]
    %v172 = vld [vmem:[#allocation7 + $0x88] sm:$0xff]
    %v173 = vld [vmem:[#allocation7 + $0x90] sm:$0xff]
    %v174 = vld [vmem:[#allocation7 + $0x98] sm:$0xff]
    %v175 = vld [vmem:[#allocation7 + $0xa0] sm:$0xff]
    %v176 = vld [vmem:[#allocation7 + $0xa8] sm:$0xff]
    %v177 = vld [vmem:[#allocation7 + $0xb0] sm:$0xff]
    %v178 = vld [vmem:[#allocation7 + $0xb8] sm:$0xff]
    %v179 = vld [vmem:[#allocation7 + $0xc0] sm:$0xff]
    %v180 = vld [vmem:[#allocation7 + $0xc8] sm:$0xff]
    %v181 = vld [vmem:[#allocation7 + $0xd0] sm:$0xff]
    %v182 = vld [vmem:[#allocation7 + $0xd8] sm:$0xff]
    %v183 = vld [vmem:[#allocation7 + $0xe0] sm:$0xff]
    %v184 = vld [vmem:[#allocation7 + $0xe8] sm:$0xff]
    %v185 = vld [vmem:[#allocation7 + $0xf0] sm:$0xff]
    %v186 = vld [vmem:[#allocation7 + $0xf8] sm:$0xff]
    %v187 = vld [vmem:[#allocation7 + $0x100] sm:$0xff]
    %v188 = vld [vmem:[#allocation7 + $0x108] sm:$0xff]
    %v189 = vld [vmem:[#allocation7 + $0x110] sm:$0xff]
    %v190 = vld [vmem:[#allocation7 + $0x118] sm:$0xff]
    %v191 = vld [vmem:[#allocation7 + $0x120] sm:$0xff]
    %v192 = vld [vmem:[#allocation7 + $0x128] sm:$0xff]
    %v193 = vld [vmem:[#allocation7 + $0x130] sm:$0xff]
    %v194 = vld [vmem:[#allocation7 + $0x138] sm:$0xff]
    %v195 = vld [vmem:[#allocation7 + $0x140] sm:$0xff]
    %v196 = vld [vmem:[#allocation7 + $0x148] sm:$0xff]
    %v197 = vld [vmem:[#allocation7 + $0x150] sm:$0xff]
    %v198 = vld [vmem:[#allocation7 + $0x158] sm:$0xff]
    %v199 = vld [vmem:[#allocation7 + $0x160] sm:$0xff]
    %v200 = vld [vmem:[#allocation7 + $0x168] sm:$0xff]
    %v201 = vld [vmem:[#allocation7 + $0x170] sm:$0xff]
    %v202 = vld [vmem:[#allocation7 + $0x178] sm:$0xff]
    %v204 = vlaneseq
    %v205 = vshrl.u32 %v204, 7
    %v206 = vsub.s32 0, %v205
    %v207 = vrot.slane %v61, %v206
    %v208 = vlaneseq
    %v209 = vshrl.u32 %v208, 7
    %v210 = vsub.s32 1, %v209
    %v211 = vrot.slane %v61, %v210
    %v212 = vlaneseq
    %v213 = vshrl.u32 %v212, 7
    %v214 = vsub.s32 2, %v213
    %v215 = vrot.slane %v61, %v214
    %219 = vmatprep.subr.mxu0 %v201
    %220 = vmatpush1.msra.mxu0 %v200
    %221 = vmatprep.subr.mxu0 %v198
    %222 = vmatpush1.msra.mxu0 %v197
    %223 = vmatprep.subr.mxu0 %v195
    %224 = vmatpush1.msra.mxu0 %v194
    %225 = vmatprep.subr.mxu0 %v192
    %226 = vmatpush1.msra.mxu0 %v191
    %227 = vmatprep.subr.mxu0 %v189
    %228 = vmatpush1.msra.mxu0 %v188
    %229 = vmatprep.subr.mxu0 %v186
    %230 = vmatpush1.msra.mxu0 %v185
    %231 = vmatprep.subr.mxu0 %v183
    %232 = vmatpush1.msra.mxu0 %v182
    %233 = vmatprep.subr.mxu0 %v180
    %234 = vmatpush1.msra.mxu0 %v179
    %235 = vmatprep.subr.mxu0 %v177
    %236 = vmatpush1.msra.mxu0 %v176
    %237 = vmatprep.subr.mxu0 %v174
    %238 = vmatpush1.msra.mxu0 %v173
    %239 = vmatprep.subr.mxu0 %v171
    %240 = vmatpush1.msra.mxu0 %v170
    %241 = vmatprep.subr.mxu0 %v168
    %242 = vmatpush1.msra.mxu0 %v167
    %243 = vmatprep.subr.mxu0 %v165
    %244 = vmatpush1.msra.mxu0 %v164
    %245 = vmatprep.subr.mxu0 %v162
    %246 = vmatpush1.msra.mxu0 %v161
    %247 = vmatprep.subr.mxu0 %v159
    %248 = vmatpush1.msra.mxu0 %v158
    %249 = vmatprep.subr.mxu0 %v156
    %250 = vmatpush1.msra.mxu0 %v155
    %251 = vmatprep.subr.mxu0 0.0
    %252 = vmatpush2.msra.mxu0 0.0
    %253 = vmatprep.subr.mxu0 0.0
    %254 = vmatpush2.msra.mxu0 0.0
    %255 = vmatprep.subr.mxu0 0.0
    %256 = vmatpush2.msra.mxu0 0.0
    %257 = vmatprep.subr.mxu0 0.0
    %258 = vmatpush2.msra.mxu0 0.0
    %259 = vmatprep.subr.mxu0 0.0
    %260 = vmatpush2.msra.mxu0 0.0
    %261 = vmatprep.subr.mxu0 0.0
    %262 = vmatpush2.msra.mxu0 0.0
    %263 = vmatprep.subr.mxu0 0.0
    %264 = vmatpush2.msra.mxu0 0.0
    %265 = vmatprep.subr.mxu0 0.0
    %266 = vmatpush2.msra.mxu0 0.0
    %267 = vmatprep.subr.mxu0 0.0
    %268 = vmatpush2.msra.mxu0 0.0
    %269 = vmatprep.subr.mxu0 0.0
    %270 = vmatpush2.msra.mxu0 0.0
    %271 = vmatprep.subr.mxu0 0.0
    %272 = vmatpush2.msra.mxu0 0.0
    %273 = vmatprep.subr.mxu0 0.0
    %274 = vmatpush2.msra.mxu0 0.0
    %275 = vmatprep.subr.mxu0 0.0
    %276 = vmatpush2.msra.mxu0 0.0
    %277 = vmatprep.subr.mxu0 0.0
    %278 = vmatpush2.msra.mxu0 0.0
    %279 = vmatprep.subr.mxu0 0.0
    %280 = vmatpush2.msra.mxu0 0.0
    %281 = vmatprep.subr.mxu0 0.0
    %282 = vmatpush2.msra.mxu0 0.0
    %283 = vmatprep.mubr.f32.mxu0 0.0
    %284 = vmatmul.mubr.f32.gmra.mxu0 %v154
    %v285 = vpop.f32.mrf.mxu0
    %v286 = vadd.f32 %v207, %v285
    %v287 = vpop.f32.mrf.mxu0
    %v288 = vadd.f32 %v211, %v287
    %289 = vdwg.mxu0
    %290 = vmatprep.subr.mxu0 0.0
    %291 = vmatpush1.msra.mxu0 %v202
    %292 = vmatprep.subr.mxu0 0.0
    %293 = vmatpush1.msra.mxu0 %v199
    %294 = vmatprep.subr.mxu0 0.0
    %295 = vmatpush1.msra.mxu0 %v196
    %296 = vmatprep.subr.mxu0 0.0
    %297 = vmatpush1.msra.mxu0 %v193
    %298 = vmatprep.subr.mxu0 0.0
    %299 = vmatpush1.msra.mxu0 %v190
    %300 = vmatprep.subr.mxu0 0.0
    %301 = vmatpush1.msra.mxu0 %v187
    %302 = vmatprep.subr.mxu0 0.0
    %303 = vmatpush1.msra.mxu0 %v184
    %304 = vmatprep.subr.mxu0 0.0
    %305 = vmatpush1.msra.mxu0 %v181
    %306 = vmatprep.subr.mxu0 0.0
    %307 = vmatpush1.msra.mxu0 %v178
    %308 = vmatprep.subr.mxu0 0.0
    %309 = vmatpush1.msra.mxu0 %v175
    %310 = vmatprep.subr.mxu0 0.0
    %311 = vmatpush1.msra.mxu0 %v172
    %312 = vmatprep.subr.mxu0 0.0
    %313 = vmatpush1.msra.mxu0 %v169
    %314 = vmatprep.subr.mxu0 0.0
    %315 = vmatpush1.msra.mxu0 %v166
    %316 = vmatprep.subr.mxu0 0.0
    %317 = vmatpush1.msra.mxu0 %v163
    %318 = vmatprep.subr.mxu0 0.0
    %319 = vmatpush1.msra.mxu0 %v160
    %320 = vmatprep.subr.mxu0 0.0
    %321 = vmatpush1.msra.mxu0 %v157
    %322 = vmatprep.subr.mxu0 0.0
    %323 = vmatpush2.msra.mxu0 0.0
    %324 = vmatprep.subr.mxu0 0.0
    %325 = vmatpush2.msra.mxu0 0.0
    %326 = vmatprep.subr.mxu0 0.0
    %327 = vmatpush2.msra.mxu0 0.0
    %328 = vmatprep.subr.mxu0 0.0
    %329 = vmatpush2.msra.mxu0 0.0
    %330 = vmatprep.subr.mxu0 0.0
    %331 = vmatpush2.msra.mxu0 0.0
    %332 = vmatprep.subr.mxu0 0.0
    %333 = vmatpush2.msra.mxu0 0.0
    %334 = vmatprep.subr.mxu0 0.0
    %335 = vmatpush2.msra.mxu0 0.0
    %336 = vmatprep.subr.mxu0 0.0
    %337 = vmatpush2.msra.mxu0 0.0
    %338 = vmatprep.subr.mxu0 0.0
    %339 = vmatpush2.msra.mxu0 0.0
    %340 = vmatprep.subr.mxu0 0.0
    %341 = vmatpush2.msra.mxu0 0.0
    %342 = vmatprep.subr.mxu0 0.0
    %343 = vmatpush2.msra.mxu0 0.0
    %344 = vmatprep.subr.mxu0 0.0
    %345 = vmatpush2.msra.mxu0 0.0
    %346 = vmatprep.subr.mxu0 0.0
    %347 = vmatpush2.msra.mxu0 0.0
    %348 = vmatprep.subr.mxu0 0.0
    %349 = vmatpush2.msra.mxu0 0.0
    %350 = vmatprep.subr.mxu0 0.0
    %351 = vmatpush2.msra.mxu0 0.0
    %352 = vmatprep.subr.mxu0 0.0
    %353 = vmatpush2.msra.mxu0 0.0
    %354 = vmatprep.mubr.f32.mxu0 0.0
    %355 = vmatmul.mubr.f32.gmra.mxu0 %v154
    %v356 = vpop.f32.mrf.mxu0
    %v357 = vadd.f32 %v215, %v356
    %v358 = vpop.f32.mrf.mxu0
    %359 = vdwg.mxu0
    %v360 = vadd.f32 %v58, %v57
    %v361 = vmul.f32 %v286, %v57
    %v362 = vmul.f32 %v288, %v360
    %v363 = vadd.f32 %v361, %v362
    %v364 = vsub.f32 %v57, %v59
    %v365 = vmul.f32 %v357, %v364
    %v366 = vadd.f32 %v363, %v365
    %367 = vst [vmem:[#allocation8] sm:$0xff] %v366
    %368 = vst [vmem:[#allocation8 + $0x8] sm:$0xff] %v360
    // Predicated region
    $region30: #{tpu_custom_call.1} parent=1 // pred_check
      _
    $region31: #{tpu_custom_call.1} parent=1 // pred_check_branch
      %370 = sbr.rel (0) target = $region33
    $region32: #{tpu_custom_call.1} parent=1 // pred_region
      %s372 = ssub.s32 256, 256
      %373 = vsyncadd [#allocation4], %s372
      %s375 = sshll.u32 [#allocation8], 4
      %s376 = int_to_ptr.vmem [resolvable:$true] %s375
      %378 = dma.vmem_to_hbm [thread:$0]  %s376, 256, %s4, [#allocation4]
    $region33: #{tpu_custom_call.1} parent=1 // pred_fallthru
      _
    // Predicated region
    $region34: #{tpu_custom_call.1} parent=1 // pred_check
      _
    $region35: #{tpu_custom_call.1} parent=1 // pred_check_branch
      %380 = sbr.rel (0) target = $region37
    $region36: #{tpu_custom_call.1} parent=1 // pred_region
      %381 = dma.done [#allocation4], 256
    $region37: #{tpu_custom_call.1} parent=1 // pred_fallthru
      _
    %382 = vsyncpa [#allocation3], 1
    %383 = vsyncpa [#allocation6], 1
    %384 = vsyncpa [#allocation4], 1

</llo_original>
